<compile_context>
chip_gen: v5e
topology: v5e:2x2
jax: 0.10.0
libtpu: 0.0.40
codegen_flags: <defaults>
</compile_context>

<pallas_src>
import math
from functools import partial

import jax
import jax.numpy as jnp
from jax import lax
from jax.experimental import pallas as pl
from jax.experimental.pallas import tpu as pltpu


def _attn_kernel(*refs, num_heads, head_dim, has_mask, compute_dtype):
    if has_mask:
        x_ref, wqkv_ref, wo_ref, mask_ref, o_ref, ctx_ref = refs
    else:
        x_ref, wqkv_ref, wo_ref, o_ref, ctx_ref = refs
        mask_ref = None

    L, D = x_ref.shape          # one batch element (L rows) per grid step
    H, Hd = num_heads, head_dim

    # ----- fused QKV projection: one MXU matmul, N = 3*H*Hd ------------------
    x = x_ref[...].astype(compute_dtype)
    qkv = jnp.dot(x, wqkv_ref[...], preferred_element_type=jnp.float32)  # (L, 3*H*Hd) f32

    mask = mask_ref[...] if has_mask else None

    # ----- per-head attention (static unroll; scale folded into Q weights) ---
    # TODO(synk): for large L tile the KV axis with an online-softmax
    # (flash-style) inner loop instead of materializing the full (L, L) scores.
    for h in range(H):
        q_h = qkv[:, h * Hd:(h + 1) * Hd].astype(compute_dtype)
        k_h = qkv[:, (H + h) * Hd:(H + h + 1) * Hd].astype(compute_dtype)
        v_h = qkv[:, (2 * H + h) * Hd:(2 * H + h + 1) * Hd].astype(compute_dtype)

        # scores = q @ k^T without an explicit transpose (MXU consumes K as-is)
        s = lax.dot_general(
            q_h, k_h,
            dimension_numbers=(((1,), (1,)), ((), ())),
            preferred_element_type=jnp.float32)                          # (L, L) f32
        if mask is not None:
            s = s + mask

        # numerically-stable softmax, all in f32 (works on v5e: no bf16 VPU/EUP)
        m = jnp.max(s, axis=-1, keepdims=True)
        e = jnp.exp(s - m)
        denom = jnp.sum(e, axis=-1, keepdims=True)

        ctx_h = jnp.dot(e.astype(compute_dtype), v_h,
                        preferred_element_type=jnp.float32)              # (L, Hd)
        ctx_h = ctx_h * pl.reciprocal(denom, approx=True)                # EUP slot, ~free

        # place this head's context in its lane slot of the (L, H*Hd) scratch
        ctx_ref[:, h * Hd:(h + 1) * Hd] = ctx_h

    # ----- fused output projection + head-sum: one matmul with K = H*Hd ------
    out = jnp.dot(ctx_ref[...].astype(compute_dtype), wo_ref[...],
                  preferred_element_type=jnp.float32)                    # (L, D)
    o_ref[...] = out.astype(o_ref.dtype)


def temporal_depth_encoder_attention(x, wq, wk, wv, wo, mask=None, *,
                                     num_heads, head_dim,
                                     compute_dtype=jnp.bfloat16):
    """x: (B, L, D); w{q,k,v}: (D, H*Hd); wo: (H*Hd, D); mask: additive (L, L) or None."""
    B, L, D = x.shape
    H, Hd = num_heads, head_dim
    assert wq.shape == (D, H * Hd) and wk.shape == (D, H * Hd) and wv.shape == (D, H * Hd)
    assert wo.shape == (H * Hd, D)

    # One-time wrapper-side weight packing (XLA):
    #   columns = [Q_0..Q_{H-1} | K_0..K_{H-1} | V_0..V_{H-1}], each Hd wide,
    #   with the 1/sqrt(Hd) scale folded into the Q columns.
    scale = 1.0 / math.sqrt(Hd)
    wqkv = jnp.concatenate([wq * scale, wk, wv], axis=-1).astype(compute_dtype)  # (D, 3*H*Hd)
    wo_c = wo.astype(compute_dtype)                                              # (H*Hd, D)

    # Row-dense 2D I/O: rows = (b, l), lanes = features.  No in-kernel reshape.
    x2 = x.reshape(B * L, D)

    has_mask = mask is not None
    if has_mask:
        # TODO(synk): only a single additive (L, L) mask broadcast over batch and
        # heads is supported; per-batch / per-head (B, 1, L, L) masks are not.
        mask = jnp.asarray(mask, dtype=jnp.float32).reshape(L, L)

    kernel = partial(_attn_kernel, num_heads=H, head_dim=Hd,
                     has_mask=has_mask, compute_dtype=compute_dtype)

    # TODO(synk): weight/mask blocks are grid-invariant; single-buffering them
    # (pipeline_mode=pl.Buffered(1)) would halve their VMEM footprint on v7x.
    in_specs = [
        pl.BlockSpec((L, D), lambda b: (b, 0)),              # one batch element per step
        pl.BlockSpec((D, 3 * H * Hd), lambda b: (0, 0)),     # fused QKV weights (constant)
        pl.BlockSpec((H * Hd, D), lambda b: (0, 0)),         # output weights (constant)
    ]
    args = [x2, wqkv, wo_c]
    if has_mask:                                             # no zero-mask DMA when absent
        in_specs.append(pl.BlockSpec((L, L), lambda b: (0, 0)))
        args.append(mask)

    # TODO(synk): for huge B with tiny L, pack several batch elements per grid
    # step (rows = block_b*L) so per-step work stays above the ~0.35us overhead.
    out2 = pl.pallas_call(
        kernel,
        out_shape=jax.ShapeDtypeStruct((B * L, D), x.dtype),
        grid_spec=pltpu.PrefetchScalarGridSpec(
            num_scalar_prefetch=0,
            grid=(B,),                                       # >=2 parallel steps when B>=2
            in_specs=in_specs,
            out_specs=pl.BlockSpec((L, D), lambda b: (b, 0)),
            scratch_shapes=[pltpu.VMEM((L, H * Hd), jnp.float32)],
        ),
        compiler_params=pltpu.CompilerParams(
            dimension_semantics=("parallel",)),
    )(*args)
    return out2.reshape(B, L, D)


def _reference(x, wq, wk, wv, wo, mask, num_heads, head_dim):
    B, L, D = x.shape
    q = (x @ wq).reshape(B, L, num_heads, head_dim).transpose(0, 2, 1, 3)
    k = (x @ wk).reshape(B, L, num_heads, head_dim).transpose(0, 2, 1, 3)
    v = (x @ wv).reshape(B, L, num_heads, head_dim).transpose(0, 2, 1, 3)
    scores = jnp.einsum("bhqd,bhkd->bhqk", q, k) / math.sqrt(head_dim)
    if mask is not None:
        scores = scores + mask
    attn = jax.nn.softmax(scores, axis=-1)
    out = jnp.einsum("bhqk,bhkd->bhqd", attn, v)
    out = out.transpose(0, 2, 1, 3).reshape(B, L, num_heads * head_dim)
    return out @ wo


if __name__ == "__main__":
    # Small config consistent with the module's forward:
    B, L = 2, 8
    hidden_dim = 32           # encoder_audio_hidden_dim
    num_heads = 4             # encoder_audio_num_heads
    head_dim = 8              # encoder_audio_head_dim
    HHd = num_heads * head_dim

    key = jax.random.PRNGKey(0)
    kx, kq, kk, kv, ko = jax.random.split(key, 5)

    x = jax.random.normal(kx, (B, L, hidden_dim), dtype=jnp.float32)
    # Deterministic param init (nn.Linear-like scale), stored as (in, out).
    wq = jax.random.normal(kq, (hidden_dim, HHd), dtype=jnp.float32) / math.sqrt(hidden_dim)
    wk = jax.random.normal(kk, (hidden_dim, HHd), dtype=jnp.float32) / math.sqrt(hidden_dim)
    wv = jax.random.normal(kv, (hidden_dim, HHd), dtype=jnp.float32) / math.sqrt(hidden_dim)
    wo = jax.random.normal(ko, (HHd, hidden_dim), dtype=jnp.float32) / math.sqrt(HHd)

    # --- f32 compute path, no mask (tight tolerance; only approx reciprocal drift) ---
    out_f32 = temporal_depth_encoder_attention(
        x, wq, wk, wv, wo, mask=None, num_heads=num_heads, head_dim=head_dim,
        compute_dtype=jnp.float32)
    out_f32 = jax.block_until_ready(out_f32)
    ref = _reference(x, wq, wk, wv, wo, None, num_heads, head_dim)
    assert out_f32.shape == (B, L, hidden_dim)
    assert jnp.allclose(out_f32, ref, atol=5e-3, rtol=5e-3), "f32 no-mask output mismatch"

    # --- f32 compute path with additive (causal) mask ---
    causal = jnp.where(jnp.tril(jnp.ones((L, L), dtype=bool)), 0.0, -1e9).astype(jnp.float32)
    out_m = temporal_depth_encoder_attention(
        x, wq, wk, wv, wo, mask=causal, num_heads=num_heads, head_dim=head_dim,
        compute_dtype=jnp.float32)
    out_m = jax.block_until_ready(out_m)
    ref_m = _reference(x, wq, wk, wv, wo, causal, num_heads, head_dim)
    assert jnp.allclose(out_m, ref_m, atol=5e-3, rtol=5e-3), "f32 masked output mismatch"

    # --- default bf16-matmul path (f32 accumulation / softmax) ---
    out_bf = temporal_depth_encoder_attention(
        x, wq, wk, wv, wo, mask=None, num_heads=num_heads, head_dim=head_dim)
    out_bf = jax.block_until_ready(out_bf)
    # Compare against a reference fed with bf16-quantized inputs so only the
    # in-kernel bf16 recasts contribute residual error.
    q16 = lambda a: a.astype(jnp.bfloat16).astype(jnp.float32)
    ref_bf = _reference(q16(x), q16(wq), q16(wk), q16(wv), q16(wo), None,
                        num_heads, head_dim)
    assert out_bf.shape == (B, L, hidden_dim)
    assert jnp.allclose(out_bf, ref_bf, atol=5e-2, rtol=5e-2), "bf16 output mismatch"

    print("KERNEL_OK")
</pallas_src>

<mosaic_0001>
module attributes {stable_mosaic.version = 11 : i64} {
  func.func @_attn_kernel(%arg0: i32, %arg1: memref<8x32xf32, #tpu.memory_space<vmem>>, %arg2: memref<32x96xf32, #tpu.memory_space<vmem>>, %arg3: memref<32x32xf32, #tpu.memory_space<vmem>>, %arg4: memref<8x32xf32, #tpu.memory_space<vmem>>, %arg5: memref<8x32xf32, #tpu.memory_space<vmem>>) attributes {dimension_semantics = [#tpu.dimension_semantics<parallel>], iteration_bounds = array<i64: 2>, scalar_prefetch = 0 : i64, scratch_operands = 1 : i64, tpu.core_type = #tpu.core_type<tc>, window_params = [{transform_indices = @transform_0, window_bounds = array<i64: 8, 32>}, {pipeline_mode = #tpu.pipeline_mode<synchronous>, transform_indices = @transform_1, window_bounds = array<i64: 32, 96>}, {pipeline_mode = #tpu.pipeline_mode<synchronous>, transform_indices = @transform_2, window_bounds = array<i64: 32, 32>}, {transform_indices = @transform_3, window_bounds = array<i64: 8, 32>}]} {
    %c0 = arith.constant 0 : index
    %c0_0 = arith.constant 0 : index
    %0 = vector.load %arg1[%c0, %c0_0] : memref<8x32xf32, #tpu.memory_space<vmem>>, vector<8x32xf32>
    %c0_1 = arith.constant 0 : index
    %c0_2 = arith.constant 0 : index
    %1 = vector.load %arg2[%c0_1, %c0_2] : memref<32x96xf32, #tpu.memory_space<vmem>>, vector<32x96xf32>
    %cst = arith.constant dense<0.000000e+00> : vector<8x96xf32>
    %2 = tpu.matmul %0, %1, %cst {dimension_numbers = #tpu.dot_dimension_numbers<[1], [0], [0], [1], [0, 0, 1, 1], [], []>} : vector<8x32xf32>, vector<32x96xf32>, vector<8x96xf32> -> vector<8x96xf32>
    %3 = vector.extract_strided_slice %2 {offsets = [0, 0], sizes = [8, 8], strides = [1, 1]} : vector<8x96xf32> to vector<8x8xf32>
    %4 = vector.extract_strided_slice %2 {offsets = [0, 32], sizes = [8, 8], strides = [1, 1]} : vector<8x96xf32> to vector<8x8xf32>
    %5 = vector.extract_strided_slice %2 {offsets = [0, 64], sizes = [8, 8], strides = [1, 1]} : vector<8x96xf32> to vector<8x8xf32>
    %cst_3 = arith.constant dense<0.000000e+00> : vector<8x8xf32>
    %6 = tpu.matmul %3, %4, %cst_3 {dimension_numbers = #tpu.dot_dimension_numbers<[1], [1], [0], [0], [0, 0, 1, 0], [], []>} : vector<8x8xf32>, vector<8x8xf32>, vector<8x8xf32> -> vector<8x8xf32>
    %cst_4 = arith.constant dense<0xFF800000> : vector<8xf32>
    %7 = vector.multi_reduction <maximumf>, %6, %cst_4 [1] : vector<8x8xf32> to vector<8xf32>
    %8 = vector.shape_cast %7 : vector<8xf32> to vector<8x1xf32>
    %9 = vector.broadcast %8 : vector<8x1xf32> to vector<8x8xf32>
    %10 = arith.subf %6, %9 : vector<8x8xf32>
    %11 = math.exp %10 : vector<8x8xf32>
    %cst_5 = arith.constant dense<0.000000e+00> : vector<8xf32>
    %12 = vector.multi_reduction <add>, %11, %cst_5 [1] : vector<8x8xf32> to vector<8xf32>
    %13 = vector.shape_cast %12 : vector<8xf32> to vector<8x1xf32>
    %cst_6 = arith.constant dense<0.000000e+00> : vector<8x8xf32>
    %14 = tpu.matmul %11, %5, %cst_6 {dimension_numbers = #tpu.dot_dimension_numbers<[1], [0], [0], [1], [0, 0, 1, 1], [], []>} : vector<8x8xf32>, vector<8x8xf32>, vector<8x8xf32> -> vector<8x8xf32>
    %15 = tpu.reciprocal %13 {approx = true} : vector<8x1xf32> -> vector<8x1xf32>
    %16 = vector.broadcast %15 : vector<8x1xf32> to vector<8x8xf32>
    %17 = arith.mulf %14, %16 : vector<8x8xf32>
    %c0_7 = arith.constant 0 : index
    %c0_8 = arith.constant 0 : index
    %18 = vector.load %arg5[%c0_7, %c0_8] : memref<8x32xf32, #tpu.memory_space<vmem>>, vector<8x8xf32>
    tpu.vector_store %arg5[%c0_7, %c0_8], %17 {strides = array<i32>} : memref<8x32xf32, #tpu.memory_space<vmem>>, vector<8x8xf32>,
    %19 = vector.extract_strided_slice %2 {offsets = [0, 8], sizes = [8, 8], strides = [1, 1]} : vector<8x96xf32> to vector<8x8xf32>
    %20 = vector.extract_strided_slice %2 {offsets = [0, 40], sizes = [8, 8], strides = [1, 1]} : vector<8x96xf32> to vector<8x8xf32>
    %21 = vector.extract_strided_slice %2 {offsets = [0, 72], sizes = [8, 8], strides = [1, 1]} : vector<8x96xf32> to vector<8x8xf32>
    %cst_9 = arith.constant dense<0.000000e+00> : vector<8x8xf32>
    %22 = tpu.matmul %19, %20, %cst_9 {dimension_numbers = #tpu.dot_dimension_numbers<[1], [1], [0], [0], [0, 0, 1, 0], [], []>} : vector<8x8xf32>, vector<8x8xf32>, vector<8x8xf32> -> vector<8x8xf32>
    %cst_10 = arith.constant dense<0xFF800000> : vector<8xf32>
    %23 = vector.multi_reduction <maximumf>, %22, %cst_10 [1] : vector<8x8xf32> to vector<8xf32>
    %24 = vector.shape_cast %23 : vector<8xf32> to vector<8x1xf32>
    %25 = vector.broadcast %24 : vector<8x1xf32> to vector<8x8xf32>
    %26 = arith.subf %22, %25 : vector<8x8xf32>
    %27 = math.exp %26 : vector<8x8xf32>
    %cst_11 = arith.constant dense<0.000000e+00> : vector<8xf32>
    %28 = vector.multi_reduction <add>, %27, %cst_11 [1] : vector<8x8xf32> to vector<8xf32>
    %29 = vector.shape_cast %28 : vector<8xf32> to vector<8x1xf32>
    %cst_12 = arith.constant dense<0.000000e+00> : vector<8x8xf32>
    %30 = tpu.matmul %27, %21, %cst_12 {dimension_numbers = #tpu.dot_dimension_numbers<[1], [0], [0], [1], [0, 0, 1, 1], [], []>} : vector<8x8xf32>, vector<8x8xf32>, vector<8x8xf32> -> vector<8x8xf32>
    %31 = tpu.reciprocal %29 {approx = true} : vector<8x1xf32> -> vector<8x1xf32>
    %32 = vector.broadcast %31 : vector<8x1xf32> to vector<8x8xf32>
    %33 = arith.mulf %30, %32 : vector<8x8xf32>
    %c0_13 = arith.constant 0 : index
    %c8 = arith.constant 8 : index
    %34 = vector.load %arg5[%c0_13, %c8] : memref<8x32xf32, #tpu.memory_space<vmem>>, vector<8x8xf32>
    tpu.vector_store %arg5[%c0_13, %c8], %33 {strides = array<i32>} : memref<8x32xf32, #tpu.memory_space<vmem>>, vector<8x8xf32>,
    %35 = vector.extract_strided_slice %2 {offsets = [0, 16], sizes = [8, 8], strides = [1, 1]} : vector<8x96xf32> to vector<8x8xf32>
    %36 = vector.extract_strided_slice %2 {offsets = [0, 48], sizes = [8, 8], strides = [1, 1]} : vector<8x96xf32> to vector<8x8xf32>
    %37 = vector.extract_strided_slice %2 {offsets = [0, 80], sizes = [8, 8], strides = [1, 1]} : vector<8x96xf32> to vector<8x8xf32>
    %cst_14 = arith.constant dense<0.000000e+00> : vector<8x8xf32>
    %38 = tpu.matmul %35, %36, %cst_14 {dimension_numbers = #tpu.dot_dimension_numbers<[1], [1], [0], [0], [0, 0, 1, 0], [], []>} : vector<8x8xf32>, vector<8x8xf32>, vector<8x8xf32> -> vector<8x8xf32>
    %cst_15 = arith.constant dense<0xFF800000> : vector<8xf32>
    %39 = vector.multi_reduction <maximumf>, %38, %cst_15 [1] : vector<8x8xf32> to vector<8xf32>
    %40 = vector.shape_cast %39 : vector<8xf32> to vector<8x1xf32>
    %41 = vector.broadcast %40 : vector<8x1xf32> to vector<8x8xf32>
    %42 = arith.subf %38, %41 : vector<8x8xf32>
    %43 = math.exp %42 : vector<8x8xf32>
    %cst_16 = arith.constant dense<0.000000e+00> : vector<8xf32>
    %44 = vector.multi_reduction <add>, %43, %cst_16 [1] : vector<8x8xf32> to vector<8xf32>
    %45 = vector.shape_cast %44 : vector<8xf32> to vector<8x1xf32>
    %cst_17 = arith.constant dense<0.000000e+00> : vector<8x8xf32>
    %46 = tpu.matmul %43, %37, %cst_17 {dimension_numbers = #tpu.dot_dimension_numbers<[1], [0], [0], [1], [0, 0, 1, 1], [], []>} : vector<8x8xf32>, vector<8x8xf32>, vector<8x8xf32> -> vector<8x8xf32>
    %47 = tpu.reciprocal %45 {approx = true} : vector<8x1xf32> -> vector<8x1xf32>
    %48 = vector.broadcast %47 : vector<8x1xf32> to vector<8x8xf32>
    %49 = arith.mulf %46, %48 : vector<8x8xf32>
    %c0_18 = arith.constant 0 : index
    %c16 = arith.constant 16 : index
    %50 = vector.load %arg5[%c0_18, %c16] : memref<8x32xf32, #tpu.memory_space<vmem>>, vector<8x8xf32>
    tpu.vector_store %arg5[%c0_18, %c16], %49 {strides = array<i32>} : memref<8x32xf32, #tpu.memory_space<vmem>>, vector<8x8xf32>,
    %51 = vector.extract_strided_slice %2 {offsets = [0, 24], sizes = [8, 8], strides = [1, 1]} : vector<8x96xf32> to vector<8x8xf32>
    %52 = vector.extract_strided_slice %2 {offsets = [0, 56], sizes = [8, 8], strides = [1, 1]} : vector<8x96xf32> to vector<8x8xf32>
    %53 = vector.extract_strided_slice %2 {offsets = [0, 88], sizes = [8, 8], strides = [1, 1]} : vector<8x96xf32> to vector<8x8xf32>
    %cst_19 = arith.constant dense<0.000000e+00> : vector<8x8xf32>
    %54 = tpu.matmul %51, %52, %cst_19 {dimension_numbers = #tpu.dot_dimension_numbers<[1], [1], [0], [0], [0, 0, 1, 0], [], []>} : vector<8x8xf32>, vector<8x8xf32>, vector<8x8xf32> -> vector<8x8xf32>
    %cst_20 = arith.constant dense<0xFF800000> : vector<8xf32>
    %55 = vector.multi_reduction <maximumf>, %54, %cst_20 [1] : vector<8x8xf32> to vector<8xf32>
    %56 = vector.shape_cast %55 : vector<8xf32> to vector<8x1xf32>
    %57 = vector.broadcast %56 : vector<8x1xf32> to vector<8x8xf32>
    %58 = arith.subf %54, %57 : vector<8x8xf32>
    %59 = math.exp %58 : vector<8x8xf32>
    %cst_21 = arith.constant dense<0.000000e+00> : vector<8xf32>
    %60 = vector.multi_reduction <add>, %59, %cst_21 [1] : vector<8x8xf32> to vector<8xf32>
    %61 = vector.shape_cast %60 : vector<8xf32> to vector<8x1xf32>
    %cst_22 = arith.constant dense<0.000000e+00> : vector<8x8xf32>
    %62 = tpu.matmul %59, %53, %cst_22 {dimension_numbers = #tpu.dot_dimension_numbers<[1], [0], [0], [1], [0, 0, 1, 1], [], []>} : vector<8x8xf32>, vector<8x8xf32>, vector<8x8xf32> -> vector<8x8xf32>
    %63 = tpu.reciprocal %61 {approx = true} : vector<8x1xf32> -> vector<8x1xf32>
    %64 = vector.broadcast %63 : vector<8x1xf32> to vector<8x8xf32>
    %65 = arith.mulf %62, %64 : vector<8x8xf32>
    %c0_23 = arith.constant 0 : index
    %c24 = arith.constant 24 : index
    %66 = vector.load %arg5[%c0_23, %c24] : memref<8x32xf32, #tpu.memory_space<vmem>>, vector<8x8xf32>
    tpu.vector_store %arg5[%c0_23, %c24], %65 {strides = array<i32>} : memref<8x32xf32, #tpu.memory_space<vmem>>, vector<8x8xf32>,
    %c0_24 = arith.constant 0 : index
    %c0_25 = arith.constant 0 : index
    %67 = vector.load %arg5[%c0_24, %c0_25] : memref<8x32xf32, #tpu.memory_space<vmem>>, vector<8x32xf32>
    %c0_26 = arith.constant 0 : index
    %c0_27 = arith.constant 0 : index
    %68 = vector.load %arg3[%c0_26, %c0_27] : memref<32x32xf32, #tpu.memory_space<vmem>>, vector<32x32xf32>
    %cst_28 = arith.constant dense<0.000000e+00> : vector<8x32xf32>
    %69 = tpu.matmul %67, %68, %cst_28 {dimension_numbers = #tpu.dot_dimension_numbers<[1], [0], [0], [1], [0, 0, 1, 1], [], []>} : vector<8x32xf32>, vector<32x32xf32>, vector<8x32xf32> -> vector<8x32xf32>
    %c0_29 = arith.constant 0 : index
    %c0_30 = arith.constant 0 : index
    %70 = vector.load %arg4[%c0_29, %c0_30] : memref<8x32xf32, #tpu.memory_space<vmem>>, vector<8x32xf32>
    tpu.vector_store %arg4[%c0_29, %c0_30], %69 {strides = array<i32>} : memref<8x32xf32, #tpu.memory_space<vmem>>, vector<8x32xf32>,
    return
  }
  func.func @transform_0(%arg0: i32) -> (i32, i32) {
    %c0_i32 = arith.constant 0 : i32
    %c0_i32_0 = arith.constant 0 : i32
    return %arg0, %c0_i32 : i32, i32
  }
  func.func @transform_1(%arg0: i32) -> (i32, i32) {
    %c0_i32 = arith.constant 0 : i32
    %c0_i32_0 = arith.constant 0 : i32
    %c0_i32_1 = arith.constant 0 : i32
    return %c0_i32, %c0_i32_0 : i32, i32
  }
  func.func @transform_2(%arg0: i32) -> (i32, i32) {
    %c0_i32 = arith.constant 0 : i32
    %c0_i32_0 = arith.constant 0 : i32
    %c0_i32_1 = arith.constant 0 : i32
    return %c0_i32, %c0_i32_0 : i32, i32
  }
  func.func @transform_3(%arg0: i32) -> (i32, i32) {
    %c0_i32 = arith.constant 0 : i32
    %c0_i32_0 = arith.constant 0 : i32
    return %arg0, %c0_i32 : i32, i32
  }
}

</mosaic_0001>

<llo_original>
// kernel: tpu_custom_call.1
$region0: #{tpu_custom_call.1}
  #allocation0 [shape = 'u32[]', space=smem, size = 0x4, offset = 0x4, fixed_abs, tag = 'smem constant byte address 0x4 - core index']
  #allocation1 [shape = 'u32[72,128]{1,0:T(1,128)}', space=vmem, size = 0x9000, scoped, tag = 'internal scratch']
  #allocation2 [shape = 'f32[8,32]{1,0:T(8,128)}', space=vmem, size = 0x1000, scoped, tag = 'scratch operand']
  %s0 = inlined_call_operand.hbm [shape: f32[16,32], index: 0, kind: input, shape index: {}]
  %s1 = inlined_call_operand.hbm [shape: f32[32,96], index: 1, kind: input, shape index: {}]
  %s2 = inlined_call_operand.hbm [shape: f32[32,32], index: 2, kind: input, shape index: {}]
  %s3 = inlined_call_operand.hbm [shape: f32[16,32], index: 3, kind: output, shape index: {}]
  %s4 = sld [smem:[#allocation0]]
  $region57: #{tpu_custom_call.1} parent=0
    _
  %s6 = ssub.s32 1, %s4
  %s7 = scalar_select 0, %s6, %s4
  $region1: #{tpu_custom_call.1} parent=0
    #allocation3 [shape = 'u8[8192]{0}', space=vmem, size = 0x2000, scoped, tag = 'input window, operand 0']
    #allocation4 [shape = 's32[2]{0}', space=sflag, size = 0x8, scoped, tag = 'scoped memory for tpu_custom_call.1']
    #allocation5 [shape = 's32[2]{0}', space=sflag, size = 0x8, scoped, tag = 'scoped memory for tpu_custom_call.1']
    #allocation6 [shape = 'u8[16384]{0}', space=vmem, size = 0x4000, scoped, tag = 'input window, operand 1, single buffered']
    #allocation7 [shape = 's32[1]{0}', space=sflag, size = 0x4, scoped, tag = 'scoped memory for tpu_custom_call.1']
    #allocation8 [shape = 'u8[16384]{0}', space=vmem, size = 0x4000, scoped, tag = 'input window, operand 2, single buffered']
    #allocation9 [shape = 'u8[8192]{0}', space=vmem, size = 0x2000, scoped, tag = 'output window, operand 0']
    %8 = vsyncpa [#allocation4], 0
    %s9 = scalar_lea.sflag [#allocation4], 1
    %10 = vsyncpa %s9, 0
    %11 = vsyncpa [#allocation7], 0
    %12 = vsyncpa [#allocation5], 0
    %s13 = scalar_lea.sflag [#allocation5], 1
    %14 = vsyncpa %s13, 0
    loop: start=0, step=1, limit=4
    $region2: #{tpu_custom_call.1} parent=1 // loop_pre_header
      _
    $region3: #{tpu_custom_call.1} parent=1 // loop_header
      %s16 = sphi 0, %s20
      %p17 = scmp.ge.s32.totalorder %s16, 4
      %s26 = sphi 0, %s28
      %s29 = sphi 0, %s26
      %s30 = sphi 0, %s29
      %s46 = sphi 0, %s30
      %s50 = sphi 0, %s50
      %s52 = sphi 0, %s50
      %s53 = sphi 0, %s52
      %s67 = sphi 0, %s53
      %s71 = sphi 0, %s71
      %s73 = sphi 0, %s71
      %s74 = sphi 0, %s73
      %s88 = sphi 0, %s74
      %s94 = sphi 0, %s96
      %s97 = sphi 0, %s94
      %s98 = sphi 0, %s97
      %s114 = sphi 0, %s98
    $region4: #{tpu_custom_call.1} parent=1 // loop_header_branch
      %19 = sbr.rel (%p17) target = $region8
    $region5: #{tpu_custom_call.1} parent=1 // loop_body
      %s21 = ssub.s32 %s16, 1
      %s22 = ssub.s32 %s16, 2
      %s23 = sadd.s32 %s16, 1
      %s24 = ssub.s32 %s16, %s23
      %p25 = scmp.eq.s32.totalorder %s24, 0
      %s27 = sadd.s32 %s26, 1
      %s28 = scalar_select %p25, %s26, %s27
      %p31 = pneg %p25
      %p32 = scmp.eq.s32.totalorder %s16, 1
      %p33 = por %p31, %p32
      %p34 = scmp.ne.s32.totalorder %s26, %s29
      %p35 = scmp.eq.s32.totalorder %s16, 0
      %p36 = por %p34, %p35
      %p37 = scmp.ne.s32.totalorder %s26, %s29
      %p38 = scmp.eq.s32.totalorder %s21, 1
      %p39 = por %p37, %p38
      %p40 = scmp.ne.s32.totalorder %s29, %s30
      %p41 = scmp.eq.s32.totalorder %s21, 0
      %p42 = por %p40, %p41
      %p43 = scmp.ne.s32.totalorder %s29, %s30
      %p44 = scmp.eq.s32.totalorder %s22, 1
      %p45 = por %p43, %p44
      %p47 = scmp.ne.s32.totalorder %s30, %s46
      %p48 = scmp.eq.s32.totalorder %s22, 0
      %p49 = por %p47, %p48
      %s51 = sadd.s32 %s50, 1
      %p54 = scmp.eq.s32.totalorder %s16, 1
      %p55 = scmp.ne.s32.totalorder %s50, %s52
      %p56 = scmp.eq.s32.totalorder %s16, 0
      %p57 = por %p55, %p56
      %p58 = scmp.ne.s32.totalorder %s50, %s52
      %p59 = scmp.eq.s32.totalorder %s21, 1
      %p60 = por %p58, %p59
      %p61 = scmp.ne.s32.totalorder %s52, %s53
      %p62 = scmp.eq.s32.totalorder %s21, 0
      %p63 = por %p61, %p62
      %p64 = scmp.ne.s32.totalorder %s52, %s53
      %p65 = scmp.eq.s32.totalorder %s22, 1
      %p66 = por %p64, %p65
      %p68 = scmp.ne.s32.totalorder %s53, %s67
      %p69 = scmp.eq.s32.totalorder %s22, 0
      %p70 = por %p68, %p69
      %s72 = sadd.s32 %s71, 1
      %p75 = scmp.eq.s32.totalorder %s16, 1
      %p76 = scmp.ne.s32.totalorder %s71, %s73
      %p77 = scmp.eq.s32.totalorder %s16, 0
      %p78 = por %p76, %p77
      %p79 = scmp.ne.s32.totalorder %s71, %s73
      %p80 = scmp.eq.s32.totalorder %s21, 1
      %p81 = por %p79, %p80
      %p82 = scmp.ne.s32.totalorder %s73, %s74
      %p83 = scmp.eq.s32.totalorder %s21, 0
      %p84 = por %p82, %p83
      %p85 = scmp.ne.s32.totalorder %s73, %s74
      %p86 = scmp.eq.s32.totalorder %s22, 1
      %p87 = por %p85, %p86
      %p89 = scmp.ne.s32.totalorder %s74, %s88
      %p90 = scmp.eq.s32.totalorder %s22, 0
      %p91 = por %p89, %p90
      %s92 = ssub.s32 %s16, %s23
      %p93 = scmp.eq.s32.totalorder %s92, 0
      %s95 = sadd.s32 %s94, 1
      %s96 = scalar_select %p93, %s94, %s95
      %p99 = pneg %p93
      %p100 = scmp.eq.s32.totalorder %s16, 1
      %p101 = por %p99, %p100
      %p102 = scmp.ne.s32.totalorder %s94, %s97
      %p103 = scmp.eq.s32.totalorder %s16, 0
      %p104 = por %p102, %p103
      %p105 = scmp.ne.s32.totalorder %s94, %s97
      %p106 = scmp.eq.s32.totalorder %s21, 1
      %p107 = por %p105, %p106
      %p108 = scmp.ne.s32.totalorder %s97, %s98
      %p109 = scmp.eq.s32.totalorder %s21, 0
      %p110 = por %p108, %p109
      %p111 = scmp.ne.s32.totalorder %s97, %s98
      %p112 = scmp.eq.s32.totalorder %s22, 1
      %p113 = por %p111, %p112
      %p115 = scmp.ne.s32.totalorder %s98, %s114
      %p116 = scmp.eq.s32.totalorder %s22, 0
      %p117 = por %p115, %p116
      %p118 = scmp.le.s32.totalorder 1, %s16
      %p119 = scmp.lt.s32.totalorder %s16, 3
      %p120 = pnand %p118, %p119
      %p121 = pneg %p120
      // Predicated region
      $region9: #{tpu_custom_call.1} parent=5 // pred_check
        _
      $region10: #{tpu_custom_call.1} parent=5 // pred_check_branch
        %123 = sbr.rel (%p120) target = $region12
      $region11: #{tpu_custom_call.1} parent=5 // pred_region
        %s124 = ssub.s32 %s16, 1
        // Predicated region
        $region13: #{tpu_custom_call.1} parent=11 // pred_check
          %p125 = pneg %p63
        $region14: #{tpu_custom_call.1} parent=11 // pred_check_branch
          %127 = sbr.rel (%p125) target = $region16
        $region15: #{tpu_custom_call.1} parent=11 // pred_region
          %129 = vsyncadd [#allocation7], 0
          %s130 = sshll.u32 %s1, 4
          %s131 = int_to_ptr.hbm [resolvable:$true] %s130
          %s132 = sshll.u32 [#allocation6], 4
          %s133 = int_to_ptr.vmem [resolvable:$true] %s132
          %138 = dma.hbm_to_vmem [thread:$0]  %s131, 512, %s133, [#allocation7], 128, 128, 8
        $region16: #{tpu_custom_call.1} parent=11 // pred_fallthru
          _
        // Predicated region
        $region17: #{tpu_custom_call.1} parent=11 // pred_check
          %p139 = pneg %p84
        $region18: #{tpu_custom_call.1} parent=11 // pred_check_branch
          %141 = sbr.rel (%p139) target = $region20
        $region19: #{tpu_custom_call.1} parent=11 // pred_region
          %143 = vsyncadd [#allocation7], 0
          %s144 = sshll.u32 %s2, 4
          %s145 = int_to_ptr.hbm [resolvable:$true] %s144
          %s146 = sshll.u32 [#allocation8], 4
          %s147 = int_to_ptr.vmem [resolvable:$true] %s146
          %152 = dma.hbm_to_vmem [thread:$0]  %s145, 512, %s147, [#allocation7], 128, 128, 8
        $region20: #{tpu_custom_call.1} parent=11 // pred_fallthru
          _
      $region12: #{tpu_custom_call.1} parent=5 // pred_fallthru
        _
      %p153 = scmp.lt.s32.totalorder %s16, 2
      // Predicated region
      $region21: #{tpu_custom_call.1} parent=5 // pred_check
        %p154 = pneg %p153
      $region22: #{tpu_custom_call.1} parent=5 // pred_check_branch
        %156 = sbr.rel (%p154) target = $region24
      $region23: #{tpu_custom_call.1} parent=5 // pred_region
        // Predicated region
        $region25: #{tpu_custom_call.1} parent=23 // pred_check
          %p157 = pneg %p36
        $region26: #{tpu_custom_call.1} parent=23 // pred_check_branch
          %159 = sbr.rel (%p157) target = $region28
        $region27: #{tpu_custom_call.1} parent=23 // pred_region
          %s160 = sand.u32 %s26, 1
          %s161 = scalar_lea.sflag [#allocation4], %s160
          %s162 = sand.u32 %s26, 1
          %s163 = smul.addr %s162, 8
          %s164 = scalar_lea.vmem [#allocation3], %s163
          %166 = vsyncadd %s161, 0
          %s167 = smul.addr %s16, 8
          %s168 = scalar_lea.hbm %s0, %s167
          %s170 = sshll.u32 %s168, 4
          %s171 = int_to_ptr.hbm [resolvable:$true] %s170
          %s172 = sshll.u32 %s164, 4
          %s173 = int_to_ptr.vmem [resolvable:$true] %s172
          %175 = dma.hbm_to_vmem [thread:$0]  %s171, 128, %s173, %s161
        $region28: #{tpu_custom_call.1} parent=23 // pred_fallthru
          _
      $region24: #{tpu_custom_call.1} parent=5 // pred_fallthru
        _
      %p176 = scmp.le.s32.totalorder 1, %s16
      %p177 = scmp.lt.s32.totalorder %s16, 3
      %p178 = pnand %p176, %p177
      %p179 = pneg %p178
      // Predicated region
      $region29: #{tpu_custom_call.1} parent=5 // pred_check
        _
      $region30: #{tpu_custom_call.1} parent=5 // pred_check_branch
        %181 = sbr.rel (%p178) target = $region32
      $region31: #{tpu_custom_call.1} parent=5 // pred_region
        %s182 = ssub.s32 %s16, 1
        %s183 = sand.u32 %s29, 1
        %s184 = scalar_lea.sflag [#allocation4], %s183
        %s185 = sand.u32 %s29, 1
        %s186 = smul.addr %s185, 8
        %s187 = scalar_lea.vmem [#allocation3], %s186
        // Predicated region
        $region33: #{tpu_custom_call.1} parent=31 // pred_check
          %p188 = pneg %p42
        $region34: #{tpu_custom_call.1} parent=31 // pred_check_branch
          %190 = sbr.rel (%p188) target = $region36
        $region35: #{tpu_custom_call.1} parent=31 // pred_region
          %192 = dma.done %s184, 128
        $region36: #{tpu_custom_call.1} parent=31 // pred_fallthru
          _
        // Predicated region
        $region37: #{tpu_custom_call.1} parent=31 // pred_check
          %p193 = pneg %p63
        $region38: #{tpu_custom_call.1} parent=31 // pred_check_branch
          %195 = sbr.rel (%p193) target = $region40
        $region39: #{tpu_custom_call.1} parent=31 // pred_region
          %197 = dma.done [#allocation7], 512
        $region40: #{tpu_custom_call.1} parent=31 // pred_fallthru
          _
        // Predicated region
        $region41: #{tpu_custom_call.1} parent=31 // pred_check
          %p198 = pneg %p84
        $region42: #{tpu_custom_call.1} parent=31 // pred_check_branch
          %200 = sbr.rel (%p198) target = $region44
        $region43: #{tpu_custom_call.1} parent=31 // pred_region
          %202 = dma.done [#allocation7], 512
        $region44: #{tpu_custom_call.1} parent=31 // pred_fallthru
          _
        %s203 = sand.u32 %s29, 1
        %s204 = scalar_lea.sflag [#allocation4], %s203
        %s205 = sand.u32 %s29, 1
        %s206 = smul.addr %s205, 8
        %s207 = scalar_lea.vmem [#allocation3], %s206
        %p208 = pneg %p42
        %p209 = pneg %p39
        %p210 = pneg %p63
        %p211 = pneg %p60
        %p212 = pneg %p84
        %p213 = pneg %p81
        %p214 = pneg %p110
        %p215 = pneg %p107
        %s216 = sand.u32 %s97, 1
        %s217 = scalar_lea.sflag [#allocation5], %s216
        %s218 = sand.u32 %s97, 1
        %s219 = smul.addr %s218, 8
        %s220 = scalar_lea.vmem [#allocation9], %s219
        %v221 = vld [vmem:[%s187] sm:$0xff]
        %v222 = vld [vmem:[#allocation6] sm:$0xff]
        %v223 = vld [vmem:[#allocation6 + $0x8] sm:$0xff]
        %v224 = vld [vmem:[#allocation6 + $0x10] sm:$0xff]
        %v225 = vld [vmem:[#allocation6 + $0x18] sm:$0xff]
        %vm226 = vcmask 261120
        %v228 = vsel %vm226, %v221, 0
        %230 = vmatpush.msra.mxu0 0.0
        %231 = vmatpush.msra.mxu0 0.0
        %232 = vmatpush.msra.mxu0 0.0
        %233 = vmatpush.msra.mxu0 0.0
        %234 = vmatpush.msra.mxu0 0.0
        %235 = vmatpush.msra.mxu0 0.0
        %236 = vmatpush.msra.mxu0 0.0
        %237 = vmatpush.msra.mxu0 0.0
        %238 = vmatpush.msra.mxu0 0.0
        %239 = vmatpush.msra.mxu0 0.0
        %240 = vmatpush.msra.mxu0 0.0
        %241 = vmatpush.msra.mxu0 0.0
        %242 = vmatpush.msra.mxu0 %v225
        %243 = vmatpush.msra.mxu0 %v224
        %244 = vmatpush.msra.mxu0 %v223
        %245 = vmatpush.msra.mxu0 %v222
        %246 = vmatmul.f32.gmra.mxu0 %v228
        %v247 = vpop.f32.mrf.mxu0
        %v248 = vadd.f32 0.0, %v247
        %249 = vdwg.mxu0
        %251 = vrot.lane.b32.xlu0 %v248, 96
        %v252 = vpop.permute.xlu0 %251
        %vm253 = vcmask 64512
        %v254 = vsel %vm253, %v248, 0
        %v256 = vsel %vm253, %v252, 0
        %258 = vmatpush.xpose.msra.mxu0 0.0
        %259 = vmatpush.xpose.msra.mxu0 0.0
        %260 = vmatpush.xpose.msra.mxu0 0.0
        %261 = vmatpush.xpose.msra.mxu0 0.0
        %262 = vmatpush.xpose.msra.mxu0 0.0
        %263 = vmatpush.xpose.msra.mxu0 0.0
        %264 = vmatpush.xpose.msra.mxu0 0.0
        %265 = vmatpush.xpose.msra.mxu0 0.0
        %266 = vmatpush.xpose.msra.mxu0 0.0
        %267 = vmatpush.xpose.msra.mxu0 0.0
        %268 = vmatpush.xpose.msra.mxu0 0.0
        %269 = vmatpush.xpose.msra.mxu0 0.0
        %270 = vmatpush.xpose.msra.mxu0 0.0
        %271 = vmatpush.xpose.msra.mxu0 0.0
        %272 = vmatpush.xpose.msra.mxu0 0.0
        %273 = vmatpush.xpose.msra.mxu0 %v256
        %274 = vmatmul.f32.gmra.mxu0 %v254
        %v275 = vpop.f32.mrf.mxu0
        %v276 = vadd.f32 0.0, %v275
        %277 = vdwg.mxu0
        %v278 = vsel %vm253, %v276, -inf
        %279 = vmax.xlane.f32.xlu0 %v278
        %v280 = vpop.xlane.xlu0 %279
        %v281 = vsub.f32 %v276, %v280
        %v282 = vmul.f32 %v281, 1.442695
        %v283 = vpow.pop %v282
        %v284 = vsel %vm253, %v283, 0.0
        %285 = vadd.xlane.f32.xlu0 %v284
        %v286 = vpop.xlane.xlu0 %285
        %287 = vrot.lane.b32.xlu0 %v248, 64
        %v288 = vpop.permute.xlu0 %287
        %v291 = vsel %vm253, %v283, 0
        %293 = vmatpush.msra.mxu0 0.0
        %294 = vmatpush.msra.mxu0 0.0
        %295 = vmatpush.msra.mxu0 0.0
        %296 = vmatpush.msra.mxu0 0.0
        %297 = vmatpush.msra.mxu0 0.0
        %298 = vmatpush.msra.mxu0 0.0
        %299 = vmatpush.msra.mxu0 0.0
        %300 = vmatpush.msra.mxu0 0.0
        %301 = vmatpush.msra.mxu0 0.0
        %302 = vmatpush.msra.mxu0 0.0
        %303 = vmatpush.msra.mxu0 0.0
        %304 = vmatpush.msra.mxu0 0.0
        %305 = vmatpush.msra.mxu0 0.0
        %306 = vmatpush.msra.mxu0 0.0
        %307 = vmatpush.msra.mxu0 0.0
        %308 = vmatpush.msra.mxu0 %v288
        %309 = vmatmul.f32.gmra.mxu0 %v291
        %v310 = vpop.f32.mrf.mxu0
        %v311 = vadd.f32 0.0, %v310
        %312 = vdwg.mxu0
        %v313 = vrcp.pop %v286
        %v314 = vmul.f32 %v311, %v313
        %315 = vst.msk [vmem:[#allocation2] sm:$0xff] %vm253, %v314
        %316 = vrot.lane.b32.xlu0 %v248, 120
        %v317 = vpop.permute.xlu0 %316
        %318 = vrot.lane.b32.xlu0 %v248, 88
        %v319 = vpop.permute.xlu0 %318
        %v320 = vsel %vm253, %v317, 0
        %v322 = vsel %vm253, %v319, 0
        %324 = vmatpush.xpose.msra.mxu0 0.0
        %325 = vmatpush.xpose.msra.mxu0 0.0
        %326 = vmatpush.xpose.msra.mxu0 0.0
        %327 = vmatpush.xpose.msra.mxu0 0.0
        %328 = vmatpush.xpose.msra.mxu0 0.0
        %329 = vmatpush.xpose.msra.mxu0 0.0
        %330 = vmatpush.xpose.msra.mxu0 0.0
        %331 = vmatpush.xpose.msra.mxu0 0.0
        %332 = vmatpush.xpose.msra.mxu0 0.0
        %333 = vmatpush.xpose.msra.mxu0 0.0
        %334 = vmatpush.xpose.msra.mxu0 0.0
        %335 = vmatpush.xpose.msra.mxu0 0.0
        %336 = vmatpush.xpose.msra.mxu0 0.0
        %337 = vmatpush.xpose.msra.mxu0 0.0
        %338 = vmatpush.xpose.msra.mxu0 0.0
        %339 = vmatpush.xpose.msra.mxu0 %v322
        %340 = vmatmul.f32.gmra.mxu0 %v320
        %v341 = vpop.f32.mrf.mxu0
        %v342 = vadd.f32 0.0, %v341
        %343 = vdwg.mxu0
        %v344 = vsel %vm253, %v342, -inf
        %345 = vmax.xlane.f32.xlu0 %v344
        %v346 = vpop.xlane.xlu0 %345
        %v347 = vsub.f32 %v342, %v346
        %v348 = vmul.f32 %v347, 1.442695
        %v349 = vpow.pop %v348
        %v350 = vsel %vm253, %v349, 0.0
        %351 = vadd.xlane.f32.xlu0 %v350
        %v352 = vpop.xlane.xlu0 %351
        %353 = vrot.lane.b32.xlu0 %v248, 56
        %v354 = vpop.permute.xlu0 %353
        %v357 = vsel %vm253, %v349, 0
        %359 = vmatpush.msra.mxu0 0.0
        %360 = vmatpush.msra.mxu0 0.0
        %361 = vmatpush.msra.mxu0 0.0
        %362 = vmatpush.msra.mxu0 0.0
        %363 = vmatpush.msra.mxu0 0.0
        %364 = vmatpush.msra.mxu0 0.0
        %365 = vmatpush.msra.mxu0 0.0
        %366 = vmatpush.msra.mxu0 0.0
        %367 = vmatpush.msra.mxu0 0.0
        %368 = vmatpush.msra.mxu0 0.0
        %369 = vmatpush.msra.mxu0 0.0
        %370 = vmatpush.msra.mxu0 0.0
        %371 = vmatpush.msra.mxu0 0.0
        %372 = vmatpush.msra.mxu0 0.0
        %373 = vmatpush.msra.mxu0 0.0
        %374 = vmatpush.msra.mxu0 %v354
        %375 = vmatmul.f32.gmra.mxu0 %v357
        %v376 = vpop.f32.mrf.mxu0
        %v377 = vadd.f32 0.0, %v376
        %378 = vdwg.mxu0
        %v379 = vrcp.pop %v352
        %v380 = vmul.f32 %v377, %v379
        %382 = vrot.lane.b32.xlu0 %v380, 8
        %v383 = vpop.permute.xlu0 %382
        %vm385 = vcmask 130112
        %386 = vst.msk [vmem:[#allocation2] sm:$0xff] %vm385, %v383
        %387 = vrot.lane.b32.xlu0 %v248, 112
        %v388 = vpop.permute.xlu0 %387
        %389 = vrot.lane.b32.xlu0 %v248, 80
        %v390 = vpop.permute.xlu0 %389
        %v391 = vsel %vm253, %v388, 0
        %v393 = vsel %vm253, %v390, 0
        %395 = vmatpush.xpose.msra.mxu0 0.0
        %396 = vmatpush.xpose.msra.mxu0 0.0
        %397 = vmatpush.xpose.msra.mxu0 0.0
        %398 = vmatpush.xpose.msra.mxu0 0.0
        %399 = vmatpush.xpose.msra.mxu0 0.0
        %400 = vmatpush.xpose.msra.mxu0 0.0
        %401 = vmatpush.xpose.msra.mxu0 0.0
        %402 = vmatpush.xpose.msra.mxu0 0.0
        %403 = vmatpush.xpose.msra.mxu0 0.0
        %404 = vmatpush.xpose.msra.mxu0 0.0
        %405 = vmatpush.xpose.msra.mxu0 0.0
        %406 = vmatpush.xpose.msra.mxu0 0.0
        %407 = vmatpush.xpose.msra.mxu0 0.0
        %408 = vmatpush.xpose.msra.mxu0 0.0
        %409 = vmatpush.xpose.msra.mxu0 0.0
        %410 = vmatpush.xpose.msra.mxu0 %v393
        %411 = vmatmul.f32.gmra.mxu0 %v391
        %v412 = vpop.f32.mrf.mxu0
        %v413 = vadd.f32 0.0, %v412
        %414 = vdwg.mxu0
        %v415 = vsel %vm253, %v413, -inf
        %416 = vmax.xlane.f32.xlu0 %v415
        %v417 = vpop.xlane.xlu0 %416
        %v418 = vsub.f32 %v413, %v417
        %v419 = vmul.f32 %v418, 1.442695
        %v420 = vpow.pop %v419
        %v421 = vsel %vm253, %v420, 0.0
        %422 = vadd.xlane.f32.xlu0 %v421
        %v423 = vpop.xlane.xlu0 %422
        %424 = vrot.lane.b32.xlu0 %v248, 48
        %v425 = vpop.permute.xlu0 %424
        %v428 = vsel %vm253, %v420, 0
        %430 = vmatpush.msra.mxu0 0.0
        %431 = vmatpush.msra.mxu0 0.0
        %432 = vmatpush.msra.mxu0 0.0
        %433 = vmatpush.msra.mxu0 0.0
        %434 = vmatpush.msra.mxu0 0.0
        %435 = vmatpush.msra.mxu0 0.0
        %436 = vmatpush.msra.mxu0 0.0
        %437 = vmatpush.msra.mxu0 0.0
        %438 = vmatpush.msra.mxu0 0.0
        %439 = vmatpush.msra.mxu0 0.0
        %440 = vmatpush.msra.mxu0 0.0
        %441 = vmatpush.msra.mxu0 0.0
        %442 = vmatpush.msra.mxu0 0.0
        %443 = vmatpush.msra.mxu0 0.0
        %444 = vmatpush.msra.mxu0 0.0
        %445 = vmatpush.msra.mxu0 %v425
        %446 = vmatmul.f32.gmra.mxu0 %v428
        %v447 = vpop.f32.mrf.mxu0
        %v448 = vadd.f32 0.0, %v447
        %449 = vdwg.mxu0
        %v450 = vrcp.pop %v423
        %v451 = vmul.f32 %v448, %v450
        %453 = vrot.lane.b32.xlu0 %v451, 16
        %v454 = vpop.permute.xlu0 %453
        %vm456 = vcmask 195712
        %457 = vst.msk [vmem:[#allocation2] sm:$0xff] %vm456, %v454
        %458 = vrot.lane.b32.xlu0 %v248, 104
        %v459 = vpop.permute.xlu0 %458
        %460 = vrot.lane.b32.xlu0 %v248, 72
        %v461 = vpop.permute.xlu0 %460
        %v462 = vsel %vm253, %v459, 0
        %v464 = vsel %vm253, %v461, 0
        %466 = vmatpush.xpose.msra.mxu0 0.0
        %467 = vmatpush.xpose.msra.mxu0 0.0
        %468 = vmatpush.xpose.msra.mxu0 0.0
        %469 = vmatpush.xpose.msra.mxu0 0.0
        %470 = vmatpush.xpose.msra.mxu0 0.0
        %471 = vmatpush.xpose.msra.mxu0 0.0
        %472 = vmatpush.xpose.msra.mxu0 0.0
        %473 = vmatpush.xpose.msra.mxu0 0.0
        %474 = vmatpush.xpose.msra.mxu0 0.0
        %475 = vmatpush.xpose.msra.mxu0 0.0
        %476 = vmatpush.xpose.msra.mxu0 0.0
        %477 = vmatpush.xpose.msra.mxu0 0.0
        %478 = vmatpush.xpose.msra.mxu0 0.0
        %479 = vmatpush.xpose.msra.mxu0 0.0
        %480 = vmatpush.xpose.msra.mxu0 0.0
        %481 = vmatpush.xpose.msra.mxu0 %v464
        %482 = vmatmul.f32.gmra.mxu0 %v462
        %v483 = vpop.f32.mrf.mxu0
        %v484 = vadd.f32 0.0, %v483
        %485 = vdwg.mxu0
        %v486 = vsel %vm253, %v484, -inf
        %487 = vmax.xlane.f32.xlu0 %v486
        %v488 = vpop.xlane.xlu0 %487
        %v489 = vsub.f32 %v484, %v488
        %v490 = vmul.f32 %v489, 1.442695
        %v491 = vpow.pop %v490
        %v492 = vsel %vm253, %v491, 0.0
        %493 = vadd.xlane.f32.xlu0 %v492
        %v494 = vpop.xlane.xlu0 %493
        %495 = vrot.lane.b32.xlu0 %v248, 40
        %v496 = vpop.permute.xlu0 %495
        %v499 = vsel %vm253, %v491, 0
        %501 = vmatpush.msra.mxu0 0.0
        %502 = vmatpush.msra.mxu0 0.0
        %503 = vmatpush.msra.mxu0 0.0
        %504 = vmatpush.msra.mxu0 0.0
        %505 = vmatpush.msra.mxu0 0.0
        %506 = vmatpush.msra.mxu0 0.0
        %507 = vmatpush.msra.mxu0 0.0
        %508 = vmatpush.msra.mxu0 0.0
        %509 = vmatpush.msra.mxu0 0.0
        %510 = vmatpush.msra.mxu0 0.0
        %511 = vmatpush.msra.mxu0 0.0
        %512 = vmatpush.msra.mxu0 0.0
        %513 = vmatpush.msra.mxu0 0.0
        %514 = vmatpush.msra.mxu0 0.0
        %515 = vmatpush.msra.mxu0 0.0
        %516 = vmatpush.msra.mxu0 %v496
        %517 = vmatmul.f32.gmra.mxu0 %v499
        %v518 = vpop.f32.mrf.mxu0
        %v519 = vadd.f32 0.0, %v518
        %520 = vdwg.mxu0
        %v521 = vrcp.pop %v494
        %v522 = vmul.f32 %v519, %v521
        %524 = vrot.lane.b32.xlu0 %v522, 24
        %v525 = vpop.permute.xlu0 %524
        %vm527 = vcmask 261312
        %528 = vst.msk [vmem:[#allocation2] sm:$0xff] %vm527, %v525
        %v529 = vld [vmem:[#allocation2] sm:$0xff]
        %v530 = vld [vmem:[#allocation8] sm:$0xff]
        %v531 = vld [vmem:[#allocation8 + $0x8] sm:$0xff]
        %v532 = vld [vmem:[#allocation8 + $0x10] sm:$0xff]
        %v533 = vld [vmem:[#allocation8 + $0x18] sm:$0xff]
        %v535 = vsel %vm226, %v529, 0
        %537 = vmatpush.msra.mxu0 0.0
        %538 = vmatpush.msra.mxu0 0.0
        %539 = vmatpush.msra.mxu0 0.0
        %540 = vmatpush.msra.mxu0 0.0
        %541 = vmatpush.msra.mxu0 0.0
        %542 = vmatpush.msra.mxu0 0.0
        %543 = vmatpush.msra.mxu0 0.0
        %544 = vmatpush.msra.mxu0 0.0
        %545 = vmatpush.msra.mxu0 0.0
        %546 = vmatpush.msra.mxu0 0.0
        %547 = vmatpush.msra.mxu0 0.0
        %548 = vmatpush.msra.mxu0 0.0
        %549 = vmatpush.msra.mxu0 %v533
        %550 = vmatpush.msra.mxu0 %v532
        %551 = vmatpush.msra.mxu0 %v531
        %552 = vmatpush.msra.mxu0 %v530
        %553 = vmatmul.f32.gmra.mxu0 %v535
        %v554 = vpop.f32.mrf.mxu0
        %v555 = vadd.f32 0.0, %v554
        %556 = vdwg.mxu0
        %557 = vst.msk [vmem:[%s220] sm:$0xff] %vm226, %v555
        %s558 = sand.u32 %s97, 1
        %s559 = scalar_lea.sflag [#allocation5], %s558
        %s560 = sand.u32 %s97, 1
        %s561 = smul.addr %s560, 8
        %s562 = scalar_lea.vmem [#allocation9], %s561
        // Predicated region
        $region45: #{tpu_custom_call.1} parent=31 // pred_check
          %p563 = pneg %p107
        $region46: #{tpu_custom_call.1} parent=31 // pred_check_branch
          %565 = sbr.rel (%p563) target = $region48
        $region47: #{tpu_custom_call.1} parent=31 // pred_region
          %567 = vsyncadd %s559, 0
          %s568 = smul.addr %s21, 8
          %s569 = scalar_lea.hbm %s3, %s568
          %s571 = sshll.u32 %s562, 4
          %s572 = int_to_ptr.vmem [resolvable:$true] %s571
          %s573 = sshll.u32 %s569, 4
          %s574 = int_to_ptr.hbm [resolvable:$true] %s573
          %576 = dma.vmem_to_hbm [thread:$0]  %s572, 128, %s574, %s559
        $region48: #{tpu_custom_call.1} parent=31 // pred_fallthru
          _
      $region32: #{tpu_custom_call.1} parent=5 // pred_fallthru
        _
      %p577 = scmp.le.s32.totalorder 2, %s16
      // Predicated region
      $region49: #{tpu_custom_call.1} parent=5 // pred_check
        %p578 = pneg %p577
      $region50: #{tpu_custom_call.1} parent=5 // pred_check_branch
        %580 = sbr.rel (%p578) target = $region52
      $region51: #{tpu_custom_call.1} parent=5 // pred_region
        %s581 = ssub.s32 %s16, 2
        // Predicated region
        $region53: #{tpu_custom_call.1} parent=51 // pred_check
          %p582 = pneg %p113
        $region54: #{tpu_custom_call.1} parent=51 // pred_check_branch
          %584 = sbr.rel (%p582) target = $region56
        $region55: #{tpu_custom_call.1} parent=51 // pred_region
          %s585 = sand.u32 %s98, 1
          %s586 = scalar_lea.sflag [#allocation5], %s585
          %s587 = sand.u32 %s98, 1
          %s588 = smul.addr %s587, 8
          %s589 = scalar_lea.vmem [#allocation9], %s588
          %591 = dma.done %s586, 128
        $region56: #{tpu_custom_call.1} parent=51 // pred_fallthru
          _
      $region52: #{tpu_custom_call.1} parent=5 // pred_fallthru
        _
    $region6: #{tpu_custom_call.1} parent=1 // loop_footer
      %s20 = sadd.s32 1, %s16
    $region7: #{tpu_custom_call.1} parent=1 // loop_footer_branch
      %15 = sbr.rel target = $region3
    $region8: #{tpu_custom_call.1} parent=1 // loop_exit
      _
    %592 = vsyncpa [#allocation4], 1
    %s593 = scalar_lea.sflag [#allocation4], 1
    %594 = vsyncpa %s593, 1
    %595 = vsyncpa [#allocation7], 1
    %596 = vsyncpa [#allocation5], 1
    %s597 = scalar_lea.sflag [#allocation5], 1
    %598 = vsyncpa %s597, 1

</llo_original>
